<compile_context>
chip_gen: v7x
topology: tpu7x:2x2x1
jax: 0.10.0
libtpu: 0.0.40
codegen_flags: <defaults>
</compile_context>

<pallas_src>
import jax
import jax.numpy as jnp
from jax.experimental import pallas as pl
from jax.experimental.pallas import tpu as pltpu

_MIN_PALLAS_BYTES = 1 << 20  # below this, a fused XLA path beats two kernel launches


def _cdiv(a, b):
    return -(-a // b)


def _round_up(x, m):
    return _cdiv(x, m) * m


def _round_down(x, m):
    return (x // m) * m


def _floor_pow2(x):
    return 1 << (max(int(x), 1).bit_length() - 1)


def _tpu_generation():
    """Best-effort TPU generation (7 for v7x, 6 for v6e, ...); 0 if unknown."""
    try:
        kind = jax.devices()[0].device_kind.lower()
    except Exception:
        return 0
    for gen in (7, 6, 5, 4):
        if f"v{gen}" in kind or f"tpu{gen}" in kind:
            return gen
    return 0


def _choose_tiles(rows, hw, itemsize, budget_bytes, sublane, min_row_blocks):
    """Byte-budget-driven (tile_rows, tile_hw) for the (rows, hw) streaming max."""
    budget_elems = max(budget_bytes // itemsize, sublane * 128)
    hw_pad = _round_up(max(hw, 1), 128)  # lane padding in VMEM

    # Cap the row tile so the "parallel" row axis has >= min_row_blocks blocks
    # (keeps both v7x TensorCores fed).  No-op when rows is too small to split.
    rows_cap = rows
    if min_row_blocks > 1 and rows > sublane:
        rows_cap = min(rows, max(sublane, _round_up(_cdiv(rows, min_row_blocks), sublane)))

    if budget_elems // hw_pad >= min(sublane, rows):
        # Whole spatial extent in one step: single k iteration, fully contiguous DMA.
        tile_hw = hw
        fit_rows = _round_down(budget_elems // hw_pad, sublane)
        tile_rows = min(rows, rows_cap, max(sublane, fit_rows))
    else:
        # Spatial extent too large for one block: stream over hw with a thin row
        # tile.  Lane tile = 128 * 2**m so the in-kernel tree fold is exact and
        # traces O(log) ops.
        tile_rows = min(rows, rows_cap, 64)
        if tile_rows < rows and tile_rows % sublane:
            tile_rows = max(sublane, _round_down(tile_rows, sublane))
        chunks = max(1, budget_elems // (max(tile_rows, 1) * 128))
        tile_hw = min(128 * _floor_pow2(chunks), _round_down(hw, 128))
        tile_hw = 128 * _floor_pow2(tile_hw // 128)
    return tile_rows, tile_hw


def _lane_tree_max(x, target_width):
    """Halve the lane extent with element-wise maxes until it equals target_width.

    x.shape[1] must be target_width * 2**m; every slice is lane-tile aligned, so
    this stays on the VPU (no XLU cross-lane reduce) and traces O(log) ops.
    """
    width = x.shape[1]
    while width > target_width:
        width //= 2
        x = jnp.maximum(x[:, :width], x[:, width:2 * width])
    return x


def _pool_full_width_kernel(x_ref, o_ref):
    # Single spatial step: block covers the full H*W extent, reduce directly.
    o_ref[...] = jnp.max(x_ref[...], axis=1, keepdims=True)


def _make_streaming_pool_kernel(hw, tile_hw, needs_mask):
    """Multi-step streaming max over the flattened spatial axis.

    Hot loop: element-wise lane-tree fold into a (tile_rows, 128) VMEM scratch.
    The -inf mask (partial last tile) and the final cross-lane reduce + narrow
    store are gated to the last k step.
    """

    def kernel(x_ref, o_ref, acc_ref):
        k = pl.program_id(1)
        last = pl.num_programs(1) - 1

        @pl.when(k == 0)
        def _():
            acc_ref[...] = jnp.full(acc_ref.shape, -jnp.inf, acc_ref.dtype)

        def fold(x):
            acc_ref[...] = jnp.maximum(acc_ref[...], _lane_tree_max(x, acc_ref.shape[1]))

        if needs_mask:
            @pl.when(k != last)
            def _():
                fold(x_ref[...])

            @pl.when(k == last)
            def _():
                x = x_ref[...]
                col = jax.lax.broadcasted_iota(jnp.int32, x.shape, 1)
                neg_inf = jnp.asarray(-jnp.inf, x.dtype)
                fold(jnp.where(k * tile_hw + col < hw, x, neg_inf))
        else:
            fold(x_ref[...])

        @pl.when(k == last)
        def _():
            o_ref[...] = jnp.max(acc_ref[...], axis=1, keepdims=True)

    return kernel


def _global_max_pool_pallas(x2, block_budget_bytes=None):
    """x2: (rows, hw) float -> (rows, 1) per-row global max, via Pallas."""
    rows, hw = x2.shape
    itemsize = jnp.dtype(x2.dtype).itemsize
    # Packed-sublane multiple: 8 for f32, 16 for bf16/f16, 32 for int8/fp8.
    sublane = max(8, (8 * 4) // itemsize)

    gen = _tpu_generation()
    if gen >= 7:
        default_budget = 8 << 20   # ~8 MiB blocks amortize step overhead vs 3.2 TB/s HBM
        vmem_limit = 48 << 20      # headroom under v7x's 64 MiB physical VMEM
        min_row_blocks = 2         # keep both TensorCores fed on the parallel row axis
    else:
        default_budget = 4 << 20   # ~2-4 MiB blocks already >=85% roofline on v5e/v6e
        vmem_limit = 32 << 20
        min_row_blocks = 1
    budget = block_budget_bytes if block_budget_bytes is not None else default_budget

    tile_rows, tile_hw = _choose_tiles(rows, hw, itemsize, budget, sublane, min_row_blocks)
    grid = (pl.cdiv(rows, tile_rows), pl.cdiv(hw, tile_hw))
    needs_mask = (hw % tile_hw) != 0

    if grid[1] == 1:
        assert tile_hw == hw
        kernel = _pool_full_width_kernel
        scratch_shapes = ()
    else:
        kernel = _make_streaming_pool_kernel(hw, tile_hw, needs_mask)
        scratch_shapes = (pltpu.VMEM((tile_rows, 128), x2.dtype),)

    # (On v7x one could additionally sweep pipeline_mode=pl.Buffered(3) on the input
    # BlockSpec if profiling shows a DMA bubble at row-block boundaries.)
    return pl.pallas_call(
        kernel,
        out_shape=jax.ShapeDtypeStruct((rows, 1), x2.dtype),
        grid=grid,
        in_specs=[pl.BlockSpec((tile_rows, tile_hw), lambda i, k: (i, k))],
        out_specs=pl.BlockSpec((tile_rows, 1), lambda i, k: (i, 0)),
        scratch_shapes=scratch_shapes,
        compiler_params=pltpu.CompilerParams(
            dimension_semantics=("parallel", "arbitrary"),
            vmem_limit_bytes=vmem_limit,
        ),
        cost_estimate=pl.CostEstimate(
            flops=rows * hw,
            transcendentals=0,
            bytes_accessed=rows * hw * itemsize + rows * itemsize,
        ),
    )(x2)


def pooling_f(x, *, use_pallas=None, block_budget_bytes=None):
    """x: (N, C, H, W) float -> (N, C, 1, 1); AdaptiveMaxPool2d(1) + L2-norm over C."""
    assert jnp.issubdtype(x.dtype, jnp.floating), "PoolingF kernel expects a floating dtype"
    n, c, h, w = x.shape
    rows, hw = n * c, h * w
    itemsize = jnp.dtype(x.dtype).itemsize

    if use_pallas is None:
        use_pallas = rows * hw * itemsize >= _MIN_PALLAS_BYTES

    if use_pallas:
        pooled = _global_max_pool_pallas(x.reshape(rows, hw), block_budget_bytes)
        pooled = pooled.reshape(n, c)
    else:
        # Small-shape fallback: launch overhead would dominate; let XLA fuse it.
        pooled = jnp.max(x, axis=(2, 3))

    # L2 normalize over channels in the input dtype (matches torch:
    # norm = sqrt(sum_c pooled^2); out = pooled / (norm + 1e-7)).  pooled is only
    # N*C*itemsize bytes, so plain jnp (fused by XLA) beats a second Pallas launch.
    norm = jnp.sqrt(jnp.sum(pooled * pooled, axis=1, keepdims=True))
    out = pooled / (norm + jnp.asarray(1e-7, pooled.dtype))
    return out.reshape(n, c, 1, 1)


def _reference(x):
    pooled = jnp.max(x, axis=(2, 3))
    norm = jnp.sqrt(jnp.sum(pooled * pooled, axis=1, keepdims=True))
    return (pooled / (norm + 1e-7)).reshape(x.shape[0], x.shape[1], 1, 1)


if __name__ == "__main__":
    key = jax.random.PRNGKey(0)
    k1, k2, k3 = jax.random.split(key, 3)

    # Primary small test (module-shaped input); force the Pallas path so the kernel
    # itself is exercised even though the auto policy would pick the XLA fallback.
    x = jax.random.normal(k1, (2, 4, 16, 16), dtype=jnp.float32)
    y = pooling_f(x, use_pallas=True)
    jax.block_until_ready(y)
    assert y.shape == (2, 4, 1, 1)
    assert jnp.allclose(y, _reference(x), atol=1e-6, rtol=1e-6)

    # Auto policy on the same small shape takes the fused-XLA fallback.
    y_auto = pooling_f(x)
    jax.block_until_ready(y_auto)
    assert jnp.allclose(y_auto, _reference(x), atol=1e-6, rtol=1e-6)

    # Streaming path: a small block budget forces multiple spatial steps and a
    # masked partial last tile (H*W = 2304 is not a multiple of the lane tile).
    x2 = jax.random.normal(k2, (2, 8, 48, 48), dtype=jnp.float32)
    y2 = pooling_f(x2, use_pallas=True, block_budget_bytes=64 * 1024)
    jax.block_until_ready(y2)
    assert jnp.allclose(y2, _reference(x2), atol=1e-5, rtol=1e-5)

    # Multi-row-block path with a partial last row block (400 rows, 64-row tiles).
    x3 = jax.random.normal(k3, (4, 100, 16, 16), dtype=jnp.float32)
    y3 = pooling_f(x3, use_pallas=True, block_budget_bytes=64 * 1024)
    jax.block_until_ready(y3)
    assert jnp.allclose(y3, _reference(x3), atol=1e-5, rtol=1e-5)

    print("KERNEL_OK")
</pallas_src>

<mosaic_0001>
module attributes {stable_mosaic.version = 11 : i64} {
  func.func @_pool_full_width_kernel(%arg0: i32, %arg1: i32, %arg2: memref<8x256xf32, #tpu.memory_space<vmem>>, %arg3: memref<8x1xf32, #tpu.memory_space<vmem>>) attributes {dimension_semantics = [#tpu.dimension_semantics<parallel>, #tpu.dimension_semantics<arbitrary>], iteration_bounds = array<i64: 1, 1>, scalar_prefetch = 0 : i64, scratch_operands = 0 : i64, tpu.core_type = #tpu.core_type<tc>, window_params = [{transform_indices = @transform_0, window_bounds = array<i64: 8, 256>}, {transform_indices = @transform_1, window_bounds = array<i64: 8, 1>}]} {
    %c0 = arith.constant 0 : index
    %c0_0 = arith.constant 0 : index
    %0 = vector.load %arg2[%c0, %c0_0] : memref<8x256xf32, #tpu.memory_space<vmem>>, vector<8x256xf32>
    %cst = arith.constant dense<0xFF800000> : vector<8xf32>
    %1 = vector.multi_reduction <maximumf>, %0, %cst [1] : vector<8x256xf32> to vector<8xf32>
    %2 = vector.shape_cast %1 : vector<8xf32> to vector<8x1xf32>
    %c0_1 = arith.constant 0 : index
    %c0_2 = arith.constant 0 : index
    %3 = vector.load %arg3[%c0_1, %c0_2] : memref<8x1xf32, #tpu.memory_space<vmem>>, vector<8x1xf32>
    tpu.vector_store %arg3[%c0_1, %c0_2], %2 {strides = array<i32>} : memref<8x1xf32, #tpu.memory_space<vmem>>, vector<8x1xf32>,
    return
  }
  func.func @transform_0(%arg0: i32, %arg1: i32) -> (i32, i32) {
    %c0_i32 = arith.constant 0 : i32
    return %arg0, %arg1 : i32, i32
  }
  func.func @transform_1(%arg0: i32, %arg1: i32) -> (i32, i32) {
    %c0_i32 = arith.constant 0 : i32
    %c0_i32_0 = arith.constant 0 : i32
    return %arg0, %c0_i32 : i32, i32
  }
}

</mosaic_0001>

<llo_original>
// kernel: tpu_custom_call.1
$region0: #{tpu_custom_call.1}
  #allocation0 [shape = 'u32[]', space=smem, size = 0x4, offset = 0x4, fixed_abs, tag = 'smem constant byte address 0x4 - core index']
  #allocation1 [shape = 'u32[144,128]{1,0:T(1,128)}', space=vmem, size = 0x12000, scoped, tag = 'internal scratch']
  %s0 = inlined_call_operand.hbm [shape: f32[8,256], index: 0, kind: input, shape index: {}]
  %s1 = inlined_call_operand.vmem [shape: f32[8,1], index: 1, kind: output, shape index: {}]
  %s2 = sld [smem:[#allocation0]]
  $region18: #{tpu_custom_call.1} parent=0
    _
  %s4 = ssub.s32 1, %s2
  %s5 = scalar_select 0, %s4, %s2
  $region1: #{tpu_custom_call.1} parent=0
    #allocation2 [shape = 'u8[8192]{0}', space=vmem, size = 0x2000, scoped, tag = 'input window, operand 0, single buffered']
    #allocation3 [shape = 's32[1]{0}', space=sflag, size = 0x4, scoped, tag = 'scoped memory for tpu_custom_call.1']
    %6 = vsyncpa [#allocation3], 0
    // Predicated region
    $region2: #{tpu_custom_call.1} parent=1 // pred_check
      _
    $region3: #{tpu_custom_call.1} parent=1 // pred_check_branch
      %8 = sbr.rel (0) target = $region5
    $region4: #{tpu_custom_call.1} parent=1 // pred_region
      %s10 = ssub.s32 256, 256
      %11 = vsyncadd [#allocation3], %s10
      %s13 = sshll.u32 [#allocation2], 4
      %s14 = int_to_ptr.vmem [resolvable:$true] %s13
      %16 = dma.hbm_to_vmem [thread:$0]  %s0, 256, %s14, [#allocation3]
    $region5: #{tpu_custom_call.1} parent=1 // pred_fallthru
      _
    // Predicated region
    $region6: #{tpu_custom_call.1} parent=1 // pred_check
      _
    $region7: #{tpu_custom_call.1} parent=1 // pred_check_branch
      %18 = sbr.rel (0) target = $region9
    $region8: #{tpu_custom_call.1} parent=1 // pred_region
      %19 = dma.done [#allocation3], 256
    $region9: #{tpu_custom_call.1} parent=1 // pred_fallthru
      _
    %v20 = vld [vmem:[#allocation2] sm:$0xff]
    %v21 = vld [vmem:[#allocation2 + $0x8] sm:$0xff]
    %v22 = vmax.f32 %v20, %v21
    %23 = vmax.xlane.f32.xlu0 %v22
    %v24 = vpop.xlane.xlu0 %23
    %vm25 = vcmask 7168
    %26 = vst.msk [vmem:[%s1] sm:$0xff] %vm25, %v24
    // Predicated region
    $region10: #{tpu_custom_call.1} parent=1 // pred_check
      _
    $region11: #{tpu_custom_call.1} parent=1 // pred_check_branch
      %28 = sbr.rel (0) target = $region13
    $region12: #{tpu_custom_call.1} parent=1 // pred_region
      _
    $region13: #{tpu_custom_call.1} parent=1 // pred_fallthru
      _
    // Predicated region
    $region14: #{tpu_custom_call.1} parent=1 // pred_check
      _
    $region15: #{tpu_custom_call.1} parent=1 // pred_check_branch
      %30 = sbr.rel (0) target = $region17
    $region16: #{tpu_custom_call.1} parent=1 // pred_region
      _
    $region17: #{tpu_custom_call.1} parent=1 // pred_fallthru
      _
    %31 = vsyncpa [#allocation3], 1

</llo_original>
